<compile_context>
chip_gen: v6e
topology: v6e:2x2x1
jax: 0.10.0
libtpu: 0.0.40
codegen_flags: <defaults>
</compile_context>

<pallas_src>
import functools

import jax
import jax.numpy as jnp
from jax.experimental import pallas as pl
from jax.experimental.pallas import tpu as pltpu

IN_FEATURES = 11
IN_PAD_HOST = 16      # feature rows after cheap host-side pad (sublane aligned)
IN_PAD = 128          # feature rows after in-kernel zero concat (MXU K dim)
HIDDEN = 128
OUT_FEATURES = 1
LANE = 128
TILE_B_MAX = 4096     # batch columns (lanes) per grid step


def _round_up(a, m):
    return ((a + m - 1) // m) * m


def _pick_act_dtype():
    """bf16 elementwise (bias+ReLU) on v6e/v7x (bf16 VALU); f32 on v5e/older."""
    try:
        kind = jax.devices()[0].device_kind.lower()
    except Exception:
        return jnp.float32
    if any(tag in kind for tag in ("v6", "v7", "v8")):
        return jnp.bfloat16
    return jnp.float32


def _mlp_kernel(x_ref,
                w1_ref, b1_ref,
                w2_ref, b2_ref,
                w3_ref, b3_ref,
                w4_ref, b4_ref,
                w5_ref, b5_ref,
                o_ref, *, act_dtype):
    tile_b = x_ref.shape[1]

    # Zero-pad the feature (sublane) dim 16 -> 128 with an in-register zero
    # block: sublane-aligned concat, no VMEM scratch, no masked lane stores.
    x = jnp.concatenate(
        [x_ref[...],
         jnp.zeros((IN_PAD - IN_PAD_HOST, tile_b), jnp.bfloat16)],
        axis=0)

    def layer(h, w_ref, b_ref):
        # (128, K) bf16 @ (K, tile_b) bf16 -> f32 on the MXU.
        acc = jnp.dot(w_ref[...], h.astype(jnp.bfloat16),
                      preferred_element_type=jnp.float32)
        # Bias (per-feature column, broadcast along batch lanes) + ReLU on the
        # VPU, in bf16 on v6e/v7x and f32 on v5e.
        h_out = acc.astype(act_dtype) + b_ref[...].astype(act_dtype)
        return jnp.maximum(h_out, 0.0)

    h = layer(x, w1_ref, b1_ref)     # layers 1-4: 128-wide hidden activations
    h = layer(h, w2_ref, b2_ref)     # stored (feature, batch) = (128, tile_b)
    h = layer(h, w3_ref, b3_ref)
    h = layer(h, w4_ref, b4_ref)

    # Layer 5 (128 -> 1): per-batch-lane reduction over the 128 feature
    # sublanes -> a naturally lane-dense (1, tile_b) output row (no N=1 matmul,
    # no masked output stores).
    out = jnp.sum(h.astype(jnp.float32) * w5_ref[...], axis=0, keepdims=True)
    o_ref[...] = (out + b5_ref[...]).astype(o_ref.dtype)


def prepare_params(params):
    """One-time parameter prep (hoisted out of the per-call path): transpose
    weights to feature-major form, zero-pad W1's input dim 11 -> 128, cast the
    big matrices to bf16, keep biases / final weight column in f32."""
    w1t = jnp.zeros((HIDDEN, IN_PAD), jnp.float32)
    w1t = w1t.at[:, :IN_FEATURES].set(params["w1"].astype(jnp.float32).T)
    return dict(
        w1=w1t.astype(jnp.bfloat16),                                  # (128, 128)
        w2=params["w2"].T.astype(jnp.bfloat16),                       # (128, 128)
        w3=params["w3"].T.astype(jnp.bfloat16),
        w4=params["w4"].T.astype(jnp.bfloat16),
        w5=params["w5"].reshape(HIDDEN, 1).astype(jnp.float32),       # column
        b1=params["b1"].reshape(HIDDEN, 1).astype(jnp.float32),       # columns
        b2=params["b2"].reshape(HIDDEN, 1).astype(jnp.float32),
        b3=params["b3"].reshape(HIDDEN, 1).astype(jnp.float32),
        b4=params["b4"].reshape(HIDDEN, 1).astype(jnp.float32),
        b5=params["b5"].reshape(1, 1).astype(jnp.float32),
    )


def _revenue_model_forward(x, prepared):
    """x: (B, 11) float32. prepared: output of prepare_params. Returns (B, 1) f32."""
    B = int(x.shape[0])
    act_dtype = _pick_act_dtype()

    # Batch (lane) tiling: multiple of 128, large tiles to amortize per-step
    # overhead, but keep >= 2 grid steps so both v7x TensorCores get work.
    b128 = max(LANE, _round_up(B, LANE))
    if b128 >= 2 * LANE:
        tile_b = min(TILE_B_MAX, _round_up(b128 // 2, LANE))
    else:
        tile_b = b128
    B_pad = _round_up(b128, tile_b)
    grid = (B_pad // tile_b,)

    # Single fused host pass over the tiny (B, 11) input: transpose to
    # feature-major, cast to bf16, pad features 11 -> 16 and batch to B_pad.
    xT = jnp.zeros((IN_PAD_HOST, B_pad), jnp.bfloat16)
    xT = xT.at[:IN_FEATURES, :B].set(x.astype(jnp.bfloat16).T)

    def const(shape):
        return pl.BlockSpec(shape, lambda i: (0, 0))

    flops = B_pad * (4 * 2 * IN_PAD * HIDDEN + 3 * HIDDEN)
    bytes_accessed = (
        IN_PAD_HOST * B_pad * 2 + B_pad * 4          # x read (bf16) + out write
        + 4 * HIDDEN * HIDDEN * 2                    # bf16 weights
        + (5 * HIDDEN + 1) * 4                       # biases + w5 column + b5
    )

    kernel = functools.partial(_mlp_kernel, act_dtype=act_dtype)

    out = pl.pallas_call(
        kernel,
        out_shape=jax.ShapeDtypeStruct((1, B_pad), jnp.float32),
        grid=grid,
        in_specs=[
            pl.BlockSpec((IN_PAD_HOST, tile_b), lambda i: (0, i)),
            const((HIDDEN, IN_PAD)), const((HIDDEN, 1)),
            const((HIDDEN, HIDDEN)), const((HIDDEN, 1)),
            const((HIDDEN, HIDDEN)), const((HIDDEN, 1)),
            const((HIDDEN, HIDDEN)), const((HIDDEN, 1)),
            const((HIDDEN, 1)), const((1, 1)),
        ],
        out_specs=pl.BlockSpec((1, tile_b), lambda i: (0, i)),
        compiler_params=pltpu.CompilerParams(
            dimension_semantics=("parallel",),
            vmem_limit_bytes=32 * 1024 * 1024),
        cost_estimate=pl.CostEstimate(
            flops=int(flops), transcendentals=0,
            bytes_accessed=int(bytes_accessed)),
    )(
        xT,
        prepared["w1"], prepared["b1"],
        prepared["w2"], prepared["b2"],
        prepared["w3"], prepared["b3"],
        prepared["w4"], prepared["b4"],
        prepared["w5"], prepared["b5"],
    )
    # (1, B_pad) row -> (B, 1); padded columns are sliced off.
    return out.reshape(-1)[:B].reshape(B, OUT_FEATURES)


revenue_model_forward = jax.jit(_revenue_model_forward)


def init_params(key):
    """Deterministic init mimicking nn.Linear's U(-1/sqrt(fan_in), 1/sqrt(fan_in))."""
    keys = jax.random.split(key, 10)
    dims = [(IN_FEATURES, HIDDEN), (HIDDEN, HIDDEN), (HIDDEN, HIDDEN),
            (HIDDEN, HIDDEN), (HIDDEN, OUT_FEATURES)]
    params = {}
    for i, (fan_in, fan_out) in enumerate(dims, start=1):
        bound = 1.0 / jnp.sqrt(jnp.float32(fan_in))
        params[f"w{i}"] = jax.random.uniform(
            keys[2 * (i - 1)], (fan_in, fan_out), jnp.float32, -bound, bound)
        params[f"b{i}"] = jax.random.uniform(
            keys[2 * (i - 1) + 1], (fan_out,), jnp.float32, -bound, bound)
    return params


def reference_forward(x, params):
    h = jnp.maximum(x @ params["w1"] + params["b1"], 0.0)
    h = jnp.maximum(h @ params["w2"] + params["b2"], 0.0)
    h = jnp.maximum(h @ params["w3"] + params["b3"], 0.0)
    h = jnp.maximum(h @ params["w4"] + params["b4"], 0.0)
    return h @ params["w5"] + params["b5"]


if __name__ == "__main__":
    key = jax.random.PRNGKey(0)
    pkey, xkey = jax.random.split(key)
    params = init_params(pkey)
    prepared = prepare_params(params)   # one-time weight prep (transpose/pad/bf16)

    B = 8
    x = jax.random.normal(xkey, (B, IN_FEATURES), dtype=jnp.float32)

    out = revenue_model_forward(x, prepared)
    out = jax.block_until_ready(out)

    ref = reference_forward(x, params)
    assert out.shape == (B, OUT_FEATURES)
    # bf16 MXU inputs (f32 accumulation, bf16 elementwise on v6e+) -> slightly
    # looser tolerance than pure f32.
    assert jnp.allclose(out, ref, atol=5e-2, rtol=5e-2), "mismatch vs reference"

    print("KERNEL_OK")
</pallas_src>

<mosaic_0001>
module attributes {stable_mosaic.version = 11 : i64} {
  func.func @_mlp_kernel(%arg0: i32, %arg1: memref<16x128xbf16, #tpu.memory_space<vmem>>, %arg2: memref<128x128xbf16, #tpu.memory_space<vmem>>, %arg3: memref<128x1xf32, #tpu.memory_space<vmem>>, %arg4: memref<128x128xbf16, #tpu.memory_space<vmem>>, %arg5: memref<128x1xf32, #tpu.memory_space<vmem>>, %arg6: memref<128x128xbf16, #tpu.memory_space<vmem>>, %arg7: memref<128x1xf32, #tpu.memory_space<vmem>>, %arg8: memref<128x128xbf16, #tpu.memory_space<vmem>>, %arg9: memref<128x1xf32, #tpu.memory_space<vmem>>, %arg10: memref<128x1xf32, #tpu.memory_space<vmem>>, %arg11: memref<1x1xf32, #tpu.memory_space<vmem>>, %arg12: memref<1x128xf32, #tpu.memory_space<vmem>>) attributes {dimension_semantics = [#tpu.dimension_semantics<parallel>], iteration_bounds = array<i64: 1>, scalar_prefetch = 0 : i64, scratch_operands = 0 : i64, tpu.core_type = #tpu.core_type<tc>, window_params = [{transform_indices = @transform_0, window_bounds = array<i64: 16, 128>}, {pipeline_mode = #tpu.pipeline_mode<synchronous>, transform_indices = @transform_1, window_bounds = array<i64: 128, 128>}, {pipeline_mode = #tpu.pipeline_mode<synchronous>, transform_indices = @transform_2, window_bounds = array<i64: 128, 1>}, {pipeline_mode = #tpu.pipeline_mode<synchronous>, transform_indices = @transform_3, window_bounds = array<i64: 128, 128>}, {pipeline_mode = #tpu.pipeline_mode<synchronous>, transform_indices = @transform_4, window_bounds = array<i64: 128, 1>}, {pipeline_mode = #tpu.pipeline_mode<synchronous>, transform_indices = @transform_5, window_bounds = array<i64: 128, 128>}, {pipeline_mode = #tpu.pipeline_mode<synchronous>, transform_indices = @transform_6, window_bounds = array<i64: 128, 1>}, {pipeline_mode = #tpu.pipeline_mode<synchronous>, transform_indices = @transform_7, window_bounds = array<i64: 128, 128>}, {pipeline_mode = #tpu.pipeline_mode<synchronous>, transform_indices = @transform_8, window_bounds = array<i64: 128, 1>}, {pipeline_mode = #tpu.pipeline_mode<synchronous>, transform_indices = @transform_9, window_bounds = array<i64: 128, 1>}, {pipeline_mode = #tpu.pipeline_mode<synchronous>, transform_indices = @transform_10, window_bounds = array<i64: 1, 1>}, {transform_indices = @transform_11, window_bounds = array<i64: 1, 128>}]} {
    %c0 = arith.constant 0 : index
    %c0_0 = arith.constant 0 : index
    %0 = vector.load %arg1[%c0, %c0_0] : memref<16x128xbf16, #tpu.memory_space<vmem>>, vector<16x128xbf16>
    %cst = arith.constant 0.000000e+00 : bf16
    %1 = vector.broadcast %cst : bf16 to vector<112x128xbf16>
    %2 = tpu.concatenate %0, %1 in 0 : vector<16x128xbf16>, vector<112x128xbf16> -> vector<128x128xbf16>
    %c0_1 = arith.constant 0 : index
    %c0_2 = arith.constant 0 : index
    %3 = vector.load %arg2[%c0_1, %c0_2] : memref<128x128xbf16, #tpu.memory_space<vmem>>, vector<128x128xbf16>
    %cst_3 = arith.constant dense<0.000000e+00> : vector<128x128xf32>
    %4 = tpu.matmul %3, %2, %cst_3 {dimension_numbers = #tpu.dot_dimension_numbers<[1], [0], [0], [1], [0, 0, 1, 1], [], []>} : vector<128x128xbf16>, vector<128x128xbf16>, vector<128x128xf32> -> vector<128x128xf32>
    %c0_4 = arith.constant 0 : index
    %c0_5 = arith.constant 0 : index
    %5 = vector.load %arg3[%c0_4, %c0_5] : memref<128x1xf32, #tpu.memory_space<vmem>>, vector<128x1xf32>
    %6 = vector.broadcast %5 : vector<128x1xf32> to vector<128x128xf32>
    %7 = arith.addf %4, %6 : vector<128x128xf32>
    %cst_6 = arith.constant 0.000000e+00 : f32
    %8 = vector.broadcast %cst_6 : f32 to vector<128x128xf32>
    %9 = arith.maximumf %7, %8 : vector<128x128xf32>
    %c0_7 = arith.constant 0 : index
    %c0_8 = arith.constant 0 : index
    %10 = vector.load %arg4[%c0_7, %c0_8] : memref<128x128xbf16, #tpu.memory_space<vmem>>, vector<128x128xbf16>
    %11 = arith.truncf %9 : vector<128x128xf32> to vector<128x128xbf16>
    %cst_9 = arith.constant dense<0.000000e+00> : vector<128x128xf32>
    %12 = tpu.matmul %10, %11, %cst_9 {dimension_numbers = #tpu.dot_dimension_numbers<[1], [0], [0], [1], [0, 0, 1, 1], [], []>} : vector<128x128xbf16>, vector<128x128xbf16>, vector<128x128xf32> -> vector<128x128xf32>
    %c0_10 = arith.constant 0 : index
    %c0_11 = arith.constant 0 : index
    %13 = vector.load %arg5[%c0_10, %c0_11] : memref<128x1xf32, #tpu.memory_space<vmem>>, vector<128x1xf32>
    %14 = vector.broadcast %13 : vector<128x1xf32> to vector<128x128xf32>
    %15 = arith.addf %12, %14 : vector<128x128xf32>
    %cst_12 = arith.constant 0.000000e+00 : f32
    %16 = vector.broadcast %cst_12 : f32 to vector<128x128xf32>
    %17 = arith.maximumf %15, %16 : vector<128x128xf32>
    %c0_13 = arith.constant 0 : index
    %c0_14 = arith.constant 0 : index
    %18 = vector.load %arg6[%c0_13, %c0_14] : memref<128x128xbf16, #tpu.memory_space<vmem>>, vector<128x128xbf16>
    %19 = arith.truncf %17 : vector<128x128xf32> to vector<128x128xbf16>
    %cst_15 = arith.constant dense<0.000000e+00> : vector<128x128xf32>
    %20 = tpu.matmul %18, %19, %cst_15 {dimension_numbers = #tpu.dot_dimension_numbers<[1], [0], [0], [1], [0, 0, 1, 1], [], []>} : vector<128x128xbf16>, vector<128x128xbf16>, vector<128x128xf32> -> vector<128x128xf32>
    %c0_16 = arith.constant 0 : index
    %c0_17 = arith.constant 0 : index
    %21 = vector.load %arg7[%c0_16, %c0_17] : memref<128x1xf32, #tpu.memory_space<vmem>>, vector<128x1xf32>
    %22 = vector.broadcast %21 : vector<128x1xf32> to vector<128x128xf32>
    %23 = arith.addf %20, %22 : vector<128x128xf32>
    %cst_18 = arith.constant 0.000000e+00 : f32
    %24 = vector.broadcast %cst_18 : f32 to vector<128x128xf32>
    %25 = arith.maximumf %23, %24 : vector<128x128xf32>
    %c0_19 = arith.constant 0 : index
    %c0_20 = arith.constant 0 : index
    %26 = vector.load %arg8[%c0_19, %c0_20] : memref<128x128xbf16, #tpu.memory_space<vmem>>, vector<128x128xbf16>
    %27 = arith.truncf %25 : vector<128x128xf32> to vector<128x128xbf16>
    %cst_21 = arith.constant dense<0.000000e+00> : vector<128x128xf32>
    %28 = tpu.matmul %26, %27, %cst_21 {dimension_numbers = #tpu.dot_dimension_numbers<[1], [0], [0], [1], [0, 0, 1, 1], [], []>} : vector<128x128xbf16>, vector<128x128xbf16>, vector<128x128xf32> -> vector<128x128xf32>
    %c0_22 = arith.constant 0 : index
    %c0_23 = arith.constant 0 : index
    %29 = vector.load %arg9[%c0_22, %c0_23] : memref<128x1xf32, #tpu.memory_space<vmem>>, vector<128x1xf32>
    %30 = vector.broadcast %29 : vector<128x1xf32> to vector<128x128xf32>
    %31 = arith.addf %28, %30 : vector<128x128xf32>
    %cst_24 = arith.constant 0.000000e+00 : f32
    %32 = vector.broadcast %cst_24 : f32 to vector<128x128xf32>
    %33 = arith.maximumf %31, %32 : vector<128x128xf32>
    %c0_25 = arith.constant 0 : index
    %c0_26 = arith.constant 0 : index
    %34 = vector.load %arg10[%c0_25, %c0_26] : memref<128x1xf32, #tpu.memory_space<vmem>>, vector<128x1xf32>
    %35 = vector.broadcast %34 : vector<128x1xf32> to vector<128x128xf32>
    %36 = arith.mulf %33, %35 : vector<128x128xf32>
    %cst_27 = arith.constant dense<0.000000e+00> : vector<128xf32>
    %37 = vector.multi_reduction <add>, %36, %cst_27 [0] : vector<128x128xf32> to vector<128xf32>
    %38 = vector.shape_cast %37 : vector<128xf32> to vector<1x128xf32>
    %c0_28 = arith.constant 0 : index
    %c0_29 = arith.constant 0 : index
    %39 = vector.load %arg11[%c0_28, %c0_29] : memref<1x1xf32, #tpu.memory_space<vmem>>, vector<1x1xf32>
    %40 = vector.broadcast %39 : vector<1x1xf32> to vector<1x128xf32>
    %41 = arith.addf %38, %40 : vector<1x128xf32>
    %c0_30 = arith.constant 0 : index
    %c0_31 = arith.constant 0 : index
    %42 = vector.load %arg12[%c0_30, %c0_31] : memref<1x128xf32, #tpu.memory_space<vmem>>, vector<1x128xf32>
    tpu.vector_store %arg12[%c0_30, %c0_31], %41 {strides = array<i32>} : memref<1x128xf32, #tpu.memory_space<vmem>>, vector<1x128xf32>,
    return
  }
  func.func @transform_0(%arg0: i32) -> (i32, i32) {
    %c0_i32 = arith.constant 0 : i32
    %c0_i32_0 = arith.constant 0 : i32
    return %c0_i32, %arg0 : i32, i32
  }
  func.func @transform_1(%arg0: i32) -> (i32, i32) {
    %c0_i32 = arith.constant 0 : i32
    %c0_i32_0 = arith.constant 0 : i32
    %c0_i32_1 = arith.constant 0 : i32
    return %c0_i32, %c0_i32_0 : i32, i32
  }
  func.func @transform_2(%arg0: i32) -> (i32, i32) {
    %c0_i32 = arith.constant 0 : i32
    %c0_i32_0 = arith.constant 0 : i32
    %c0_i32_1 = arith.constant 0 : i32
    return %c0_i32, %c0_i32_0 : i32, i32
  }
  func.func @transform_3(%arg0: i32) -> (i32, i32) {
    %c0_i32 = arith.constant 0 : i32
    %c0_i32_0 = arith.constant 0 : i32
    %c0_i32_1 = arith.constant 0 : i32
    return %c0_i32, %c0_i32_0 : i32, i32
  }
  func.func @transform_4(%arg0: i32) -> (i32, i32) {
    %c0_i32 = arith.constant 0 : i32
    %c0_i32_0 = arith.constant 0 : i32
    %c0_i32_1 = arith.constant 0 : i32
    return %c0_i32, %c0_i32_0 : i32, i32
  }
  func.func @transform_5(%arg0: i32) -> (i32, i32) {
    %c0_i32 = arith.constant 0 : i32
    %c0_i32_0 = arith.constant 0 : i32
    %c0_i32_1 = arith.constant 0 : i32
    return %c0_i32, %c0_i32_0 : i32, i32
  }
  func.func @transform_6(%arg0: i32) -> (i32, i32) {
    %c0_i32 = arith.constant 0 : i32
    %c0_i32_0 = arith.constant 0 : i32
    %c0_i32_1 = arith.constant 0 : i32
    return %c0_i32, %c0_i32_0 : i32, i32
  }
  func.func @transform_7(%arg0: i32) -> (i32, i32) {
    %c0_i32 = arith.constant 0 : i32
    %c0_i32_0 = arith.constant 0 : i32
    %c0_i32_1 = arith.constant 0 : i32
    return %c0_i32, %c0_i32_0 : i32, i32
  }
  func.func @transform_8(%arg0: i32) -> (i32, i32) {
    %c0_i32 = arith.constant 0 : i32
    %c0_i32_0 = arith.constant 0 : i32
    %c0_i32_1 = arith.constant 0 : i32
    return %c0_i32, %c0_i32_0 : i32, i32
  }
  func.func @transform_9(%arg0: i32) -> (i32, i32) {
    %c0_i32 = arith.constant 0 : i32
    %c0_i32_0 = arith.constant 0 : i32
    %c0_i32_1 = arith.constant 0 : i32
    return %c0_i32, %c0_i32_0 : i32, i32
  }
  func.func @transform_10(%arg0: i32) -> (i32, i32) {
    %c0_i32 = arith.constant 0 : i32
    %c0_i32_0 = arith.constant 0 : i32
    %c0_i32_1 = arith.constant 0 : i32
    return %c0_i32, %c0_i32_0 : i32, i32
  }
  func.func @transform_11(%arg0: i32) -> (i32, i32) {
    %c0_i32 = arith.constant 0 : i32
    %c0_i32_0 = arith.constant 0 : i32
    return %c0_i32, %arg0 : i32, i32
  }
}

</mosaic_0001>

<llo_original>
// kernel: _revenue_model_forward.1
$region0: #{_revenue_model_forward.1}
  #allocation0 [shape = 'u32[]', space=smem, size = 0x4, offset = 0x4, fixed_abs, tag = 'smem constant byte address 0x4 - core index']
  #allocation1 [shape = 'u32[144,128]{1,0:T(1,128)}', space=vmem, size = 0x12000, scoped, tag = 'internal scratch']
  #allocation2 [shape = 'f32[1,1]{1,0:T(1,128)S(1)}', space=vmem, size = 0x200, scoped, tag = 'scoped memory for _revenue_model_forward.1']
  %s0 = inlined_call_operand.vmem [shape: bf16[16,128], index: 0, kind: input, shape index: {}]
  %s1 = inlined_call_operand.vmem [shape: bf16[128,128], index: 1, kind: input, shape index: {}]
  %s2 = inlined_call_operand.vmem [shape: f32[128,1], index: 2, kind: input, shape index: {}]
  %s3 = inlined_call_operand.vmem [shape: bf16[128,128], index: 3, kind: input, shape index: {}]
  %s4 = inlined_call_operand.vmem [shape: f32[128,1], index: 4, kind: input, shape index: {}]
  %s5 = inlined_call_operand.vmem [shape: bf16[128,128], index: 5, kind: input, shape index: {}]
  %s6 = inlined_call_operand.vmem [shape: f32[128,1], index: 6, kind: input, shape index: {}]
  %s7 = inlined_call_operand.vmem [shape: bf16[128,128], index: 7, kind: input, shape index: {}]
  %s8 = inlined_call_operand.vmem [shape: f32[128,1], index: 8, kind: input, shape index: {}]
  %s9 = inlined_call_operand.vmem [shape: f32[128,1], index: 9, kind: input, shape index: {}]
  %s10 = inlined_call_operand.<no memory space> [shape: f32[1,1], index: 10, kind: input, shape index: {}]
  %s11 = inlined_call_operand.vmem [shape: f32[1,128], index: 11, kind: output, shape index: {}]
  %s12 = sld [smem:[#allocation0]]
  $region54: #{_revenue_model_forward.1} parent=0
    _
  %s14 = ssub.s32 1, %s12
  %s15 = scalar_select 0, %s14, %s12
  %v16 = vstv %s10
  %17 = vst [vmem:[#allocation2] sm:$0x1] %v16
  // Predicated region
  $region2: #{_revenue_model_forward.1} parent=0 // pred_check
    _
  $region3: #{_revenue_model_forward.1} parent=0 // pred_check_branch
    %19 = sbr.rel (0) target = $region5
  $region4: #{_revenue_model_forward.1} parent=0 // pred_region
    _
  $region5: #{_revenue_model_forward.1} parent=0 // pred_fallthru
    _
  // Predicated region
  $region6: #{_revenue_model_forward.1} parent=0 // pred_check
    _
  $region7: #{_revenue_model_forward.1} parent=0 // pred_check_branch
    %21 = sbr.rel (0) target = $region9
  $region8: #{_revenue_model_forward.1} parent=0 // pred_region
    _
  $region9: #{_revenue_model_forward.1} parent=0 // pred_fallthru
    _
  // Predicated region
  $region10: #{_revenue_model_forward.1} parent=0 // pred_check
    _
  $region11: #{_revenue_model_forward.1} parent=0 // pred_check_branch
    %23 = sbr.rel (0) target = $region13
  $region12: #{_revenue_model_forward.1} parent=0 // pred_region
    _
  $region13: #{_revenue_model_forward.1} parent=0 // pred_fallthru
    _
  // Predicated region
  $region14: #{_revenue_model_forward.1} parent=0 // pred_check
    _
  $region15: #{_revenue_model_forward.1} parent=0 // pred_check_branch
    %25 = sbr.rel (0) target = $region17
  $region16: #{_revenue_model_forward.1} parent=0 // pred_region
    _
  $region17: #{_revenue_model_forward.1} parent=0 // pred_fallthru
    _
  // Predicated region
  $region18: #{_revenue_model_forward.1} parent=0 // pred_check
    _
  $region19: #{_revenue_model_forward.1} parent=0 // pred_check_branch
    %27 = sbr.rel (0) target = $region21
  $region20: #{_revenue_model_forward.1} parent=0 // pred_region
    _
  $region21: #{_revenue_model_forward.1} parent=0 // pred_fallthru
    _
  // Predicated region
  $region22: #{_revenue_model_forward.1} parent=0 // pred_check
    _
  $region23: #{_revenue_model_forward.1} parent=0 // pred_check_branch
    %29 = sbr.rel (0) target = $region25
  $region24: #{_revenue_model_forward.1} parent=0 // pred_region
    _
  $region25: #{_revenue_model_forward.1} parent=0 // pred_fallthru
    _
  // Predicated region
  $region26: #{_revenue_model_forward.1} parent=0 // pred_check
    _
  $region27: #{_revenue_model_forward.1} parent=0 // pred_check_branch
    %31 = sbr.rel (0) target = $region29
  $region28: #{_revenue_model_forward.1} parent=0 // pred_region
    _
  $region29: #{_revenue_model_forward.1} parent=0 // pred_fallthru
    _
  // Predicated region
  $region30: #{_revenue_model_forward.1} parent=0 // pred_check
    _
  $region31: #{_revenue_model_forward.1} parent=0 // pred_check_branch
    %33 = sbr.rel (0) target = $region33
  $region32: #{_revenue_model_forward.1} parent=0 // pred_region
    _
  $region33: #{_revenue_model_forward.1} parent=0 // pred_fallthru
    _
  // Predicated region
  $region34: #{_revenue_model_forward.1} parent=0 // pred_check
    _
  $region35: #{_revenue_model_forward.1} parent=0 // pred_check_branch
    %35 = sbr.rel (0) target = $region37
  $region36: #{_revenue_model_forward.1} parent=0 // pred_region
    _
  $region37: #{_revenue_model_forward.1} parent=0 // pred_fallthru
    _
  // Predicated region
  $region38: #{_revenue_model_forward.1} parent=0 // pred_check
    _
  $region39: #{_revenue_model_forward.1} parent=0 // pred_check_branch
    %37 = sbr.rel (0) target = $region41
  $region40: #{_revenue_model_forward.1} parent=0 // pred_region
    _
  $region41: #{_revenue_model_forward.1} parent=0 // pred_fallthru
    _
  // Predicated region
  $region42: #{_revenue_model_forward.1} parent=0 // pred_check
    _
  $region43: #{_revenue_model_forward.1} parent=0 // pred_check_branch
    %39 = sbr.rel (0) target = $region45
  $region44: #{_revenue_model_forward.1} parent=0 // pred_region
    _
  $region45: #{_revenue_model_forward.1} parent=0 // pred_fallthru
    _
  %v41 = vld [vmem:[%s0] sm:$0xf]
  %v42 = vld [vmem:[%s0 + $0x4] sm:$0xf]
  %v45 = vunpack.c.l.b16 %v41
  %v46 = vunpack.c.l.b16 %v42
  %v47 = vpack.c.b16 %v46, %v45
  %v49 = vld [vmem:[%s1] sm:$0xf]
  %v50 = vld [vmem:[%s1 + $0x4] sm:$0xf]
  %v51 = vld [vmem:[%s1 + $0x8] sm:$0xf]
  %v52 = vld [vmem:[%s1 + $0xc] sm:$0xf]
  %v53 = vld [vmem:[%s1 + $0x10] sm:$0xf]
  %v54 = vld [vmem:[%s1 + $0x14] sm:$0xf]
  %v55 = vld [vmem:[%s1 + $0x18] sm:$0xf]
  %v56 = vld [vmem:[%s1 + $0x1c] sm:$0xf]
  %v57 = vld [vmem:[%s1 + $0x20] sm:$0xf]
  %v58 = vld [vmem:[%s1 + $0x24] sm:$0xf]
  %v59 = vld [vmem:[%s1 + $0x28] sm:$0xf]
  %v60 = vld [vmem:[%s1 + $0x2c] sm:$0xf]
  %v61 = vld [vmem:[%s1 + $0x30] sm:$0xf]
  %v62 = vld [vmem:[%s1 + $0x34] sm:$0xf]
  %v63 = vld [vmem:[%s1 + $0x38] sm:$0xf]
  %v64 = vld [vmem:[%s1 + $0x3c] sm:$0xf]
  %v65 = vld [vmem:[%s2] sm:$0xff]
  %v66 = vld [vmem:[%s2 + $0x8] sm:$0xff]
  %v67 = vld [vmem:[%s2 + $0x10] sm:$0xff]
  %v68 = vld [vmem:[%s2 + $0x18] sm:$0xff]
  %v69 = vld [vmem:[%s2 + $0x20] sm:$0xff]
  %v70 = vld [vmem:[%s2 + $0x28] sm:$0xff]
  %v71 = vld [vmem:[%s2 + $0x30] sm:$0xff]
  %v72 = vld [vmem:[%s2 + $0x38] sm:$0xff]
  %v73 = vld [vmem:[%s2 + $0x40] sm:$0xff]
  %v74 = vld [vmem:[%s2 + $0x48] sm:$0xff]
  %v75 = vld [vmem:[%s2 + $0x50] sm:$0xff]
  %v76 = vld [vmem:[%s2 + $0x58] sm:$0xff]
  %v77 = vld [vmem:[%s2 + $0x60] sm:$0xff]
  %v78 = vld [vmem:[%s2 + $0x68] sm:$0xff]
  %v79 = vld [vmem:[%s2 + $0x70] sm:$0xff]
  %v80 = vld [vmem:[%s2 + $0x78] sm:$0xff]
  %82 = vset.pattern.permute.xlu0 0
  %83 = vperm.xlu0 %82, %v65
  %v84 = vpop.permute.xlu0 %83
  %87 = vset.pattern.permute.xlu0 0
  %88 = vperm.xlu0 %87, %v66
  %v89 = vpop.permute.xlu0 %88
  %92 = vset.pattern.permute.xlu0 0
  %93 = vperm.xlu0 %92, %v67
  %v94 = vpop.permute.xlu0 %93
  %97 = vset.pattern.permute.xlu0 0
  %98 = vperm.xlu0 %97, %v68
  %v99 = vpop.permute.xlu0 %98
  %102 = vset.pattern.permute.xlu0 0
  %103 = vperm.xlu0 %102, %v69
  %v104 = vpop.permute.xlu0 %103
  %107 = vset.pattern.permute.xlu0 0
  %108 = vperm.xlu0 %107, %v70
  %v109 = vpop.permute.xlu0 %108
  %112 = vset.pattern.permute.xlu0 0
  %113 = vperm.xlu0 %112, %v71
  %v114 = vpop.permute.xlu0 %113
  %117 = vset.pattern.permute.xlu0 0
  %118 = vperm.xlu0 %117, %v72
  %v119 = vpop.permute.xlu0 %118
  %122 = vset.pattern.permute.xlu0 0
  %123 = vperm.xlu0 %122, %v73
  %v124 = vpop.permute.xlu0 %123
  %127 = vset.pattern.permute.xlu0 0
  %128 = vperm.xlu0 %127, %v74
  %v129 = vpop.permute.xlu0 %128
  %132 = vset.pattern.permute.xlu0 0
  %133 = vperm.xlu0 %132, %v75
  %v134 = vpop.permute.xlu0 %133
  %137 = vset.pattern.permute.xlu0 0
  %138 = vperm.xlu0 %137, %v76
  %v139 = vpop.permute.xlu0 %138
  %142 = vset.pattern.permute.xlu0 0
  %143 = vperm.xlu0 %142, %v77
  %v144 = vpop.permute.xlu0 %143
  %147 = vset.pattern.permute.xlu0 0
  %148 = vperm.xlu0 %147, %v78
  %v149 = vpop.permute.xlu0 %148
  %152 = vset.pattern.permute.xlu0 0
  %153 = vperm.xlu0 %152, %v79
  %v154 = vpop.permute.xlu0 %153
  %157 = vset.pattern.permute.xlu0 0
  %158 = vperm.xlu0 %157, %v80
  %v159 = vpop.permute.xlu0 %158
  %v177 = vunpack.c.l.b16 %v49
  %v178 = vunpack.c.l.b16 %v50
  %v179 = vunpack.c.l.b16 %v51
  %v180 = vunpack.c.l.b16 %v52
  %v181 = vunpack.c.l.b16 %v53
  %v182 = vunpack.c.l.b16 %v54
  %v183 = vunpack.c.l.b16 %v55
  %v184 = vunpack.c.l.b16 %v56
  %v185 = vunpack.c.l.b16 %v57
  %v186 = vunpack.c.l.b16 %v58
  %v187 = vunpack.c.l.b16 %v59
  %v188 = vunpack.c.l.b16 %v60
  %v189 = vunpack.c.l.b16 %v61
  %v190 = vunpack.c.l.b16 %v62
  %v191 = vunpack.c.l.b16 %v63
  %v192 = vunpack.c.l.b16 %v64
  %v193 = vpack.c.b16 %v178, %v177
  %v194 = vpack.c.b16 %v180, %v179
  %v195 = vpack.c.b16 %v182, %v181
  %v196 = vpack.c.b16 %v184, %v183
  %v197 = vpack.c.b16 %v186, %v185
  %v198 = vpack.c.b16 %v188, %v187
  %v199 = vpack.c.b16 %v190, %v189
  %v200 = vpack.c.b16 %v192, %v191
  %209 = vmatprep.subr.bf16.mxu0 0
  %210 = vmatpush1.bf16.msra.mxu0 0
  %211 = vmatprep.subr.bf16.mxu0 0
  %212 = vmatpush1.bf16.msra.mxu0 0
  %213 = vmatprep.subr.bf16.mxu0 0
  %214 = vmatpush1.bf16.msra.mxu0 0
  %215 = vmatprep.subr.bf16.mxu0 0
  %216 = vmatpush1.bf16.msra.mxu0 0
  %217 = vmatprep.subr.bf16.mxu0 0
  %218 = vmatpush1.bf16.msra.mxu0 0
  %219 = vmatprep.subr.bf16.mxu0 0
  %220 = vmatpush1.bf16.msra.mxu0 0
  %221 = vmatprep.subr.bf16.mxu0 0
  %222 = vmatpush1.bf16.msra.mxu0 0
  %223 = vmatprep.subr.bf16.mxu0 0
  %224 = vmatpush1.bf16.msra.mxu0 %v47
  %225 = vmatprep.subr.bf16.mxu0 0
  %226 = vmatpush2.bf16.msra.mxu0 0
  %227 = vmatprep.subr.bf16.mxu0 0
  %228 = vmatpush2.bf16.msra.mxu0 0
  %229 = vmatprep.subr.bf16.mxu0 0
  %230 = vmatpush2.bf16.msra.mxu0 0
  %231 = vmatprep.subr.bf16.mxu0 0
  %232 = vmatpush2.bf16.msra.mxu0 0
  %233 = vmatprep.subr.bf16.mxu0 0
  %234 = vmatpush2.bf16.msra.mxu0 0
  %235 = vmatprep.subr.bf16.mxu0 0
  %236 = vmatpush2.bf16.msra.mxu0 0
  %237 = vmatprep.subr.bf16.mxu0 0
  %238 = vmatpush2.bf16.msra.mxu0 0
  %239 = vmatprep.subr.bf16.mxu0 0
  %240 = vmatpush2.bf16.msra.mxu0 0
  %241 = vmatprep.mubr.bf16.mxu0 0
  %242 = vmatmul.mubr.bf16.gmra.mxu0 %v193
  %v243 = vpop.f32.mrf.mxu0
  %v244 = vadd.f32 %v84, %v243
  %v245 = vpop.f32.mrf.mxu0
  %v246 = vpop.f32.mrf.mxu0
  %v247 = vadd.f32 %v89, %v246
  %v248 = vpop.f32.mrf.mxu0
  %249 = vmatprep.mubr.bf16.mxu0 0
  %250 = vmatmul.mubr.bf16.gmra.mxu0 %v194
  %v251 = vpop.f32.mrf.mxu0
  %v252 = vadd.f32 %v94, %v251
  %v253 = vpop.f32.mrf.mxu0
  %v254 = vpop.f32.mrf.mxu0
  %v255 = vadd.f32 %v99, %v254
  %v256 = vpop.f32.mrf.mxu0
  %257 = vmatprep.mubr.bf16.mxu0 0
  %258 = vmatmul.mubr.bf16.gmra.mxu0 %v195
  %v259 = vpop.f32.mrf.mxu0
  %v260 = vadd.f32 %v104, %v259
  %v261 = vpop.f32.mrf.mxu0
  %v262 = vpop.f32.mrf.mxu0
  %v263 = vadd.f32 %v109, %v262
  %v264 = vpop.f32.mrf.mxu0
  %265 = vmatprep.mubr.bf16.mxu0 0
  %266 = vmatmul.mubr.bf16.gmra.mxu0 %v196
  %v267 = vpop.f32.mrf.mxu0
  %v268 = vadd.f32 %v114, %v267
  %v269 = vpop.f32.mrf.mxu0
  %v270 = vpop.f32.mrf.mxu0
  %v271 = vadd.f32 %v119, %v270
  %v272 = vpop.f32.mrf.mxu0
  %273 = vmatprep.mubr.bf16.mxu0 0
  %274 = vmatmul.mubr.bf16.gmra.mxu0 %v197
  %v275 = vpop.f32.mrf.mxu0
  %v276 = vadd.f32 %v124, %v275
  %v277 = vpop.f32.mrf.mxu0
  %v278 = vpop.f32.mrf.mxu0
  %v279 = vadd.f32 %v129, %v278
  %v280 = vpop.f32.mrf.mxu0
  %281 = vmatprep.mubr.bf16.mxu0 0
  %282 = vmatmul.mubr.bf16.gmra.mxu0 %v198
  %v283 = vpop.f32.mrf.mxu0
  %v284 = vadd.f32 %v134, %v283
  %v285 = vpop.f32.mrf.mxu0
  %v286 = vpop.f32.mrf.mxu0
  %v287 = vadd.f32 %v139, %v286
  %v288 = vpop.f32.mrf.mxu0
  %289 = vmatprep.mubr.bf16.mxu0 0
  %290 = vmatmul.mubr.bf16.gmra.mxu0 %v199
  %v291 = vpop.f32.mrf.mxu0
  %v292 = vadd.f32 %v144, %v291
  %v293 = vpop.f32.mrf.mxu0
  %v294 = vpop.f32.mrf.mxu0
  %v295 = vadd.f32 %v149, %v294
  %v296 = vpop.f32.mrf.mxu0
  %297 = vmatprep.mubr.bf16.mxu0 0
  %298 = vmatmul.mubr.bf16.gmra.mxu0 %v200
  %v299 = vpop.f32.mrf.mxu0
  %v300 = vadd.f32 %v154, %v299
  %v301 = vpop.f32.mrf.mxu0
  %v302 = vpop.f32.mrf.mxu0
  %v303 = vadd.f32 %v159, %v302
  %v304 = vpop.f32.mrf.mxu0
  %305 = vdwg.mxu0
  %v306 = vmax.f32 %v244, 0.0
  %v307 = vmax.f32 %v247, 0.0
  %v308 = vmax.f32 %v252, 0.0
  %v309 = vmax.f32 %v255, 0.0
  %v310 = vmax.f32 %v260, 0.0
  %v311 = vmax.f32 %v263, 0.0
  %v312 = vmax.f32 %v268, 0.0
  %v313 = vmax.f32 %v271, 0.0
  %v314 = vmax.f32 %v276, 0.0
  %v315 = vmax.f32 %v279, 0.0
  %v316 = vmax.f32 %v284, 0.0
  %v317 = vmax.f32 %v287, 0.0
  %v318 = vmax.f32 %v292, 0.0
  %v319 = vmax.f32 %v295, 0.0
  %v320 = vmax.f32 %v300, 0.0
  %v321 = vmax.f32 %v303, 0.0
  %v322 = vld [vmem:[%s3] sm:$0xf]
  %v323 = vld [vmem:[%s3 + $0x4] sm:$0xf]
  %v324 = vld [vmem:[%s3 + $0x8] sm:$0xf]
  %v325 = vld [vmem:[%s3 + $0xc] sm:$0xf]
  %v326 = vld [vmem:[%s3 + $0x10] sm:$0xf]
  %v327 = vld [vmem:[%s3 + $0x14] sm:$0xf]
  %v328 = vld [vmem:[%s3 + $0x18] sm:$0xf]
  %v329 = vld [vmem:[%s3 + $0x1c] sm:$0xf]
  %v330 = vld [vmem:[%s3 + $0x20] sm:$0xf]
  %v331 = vld [vmem:[%s3 + $0x24] sm:$0xf]
  %v332 = vld [vmem:[%s3 + $0x28] sm:$0xf]
  %v333 = vld [vmem:[%s3 + $0x2c] sm:$0xf]
  %v334 = vld [vmem:[%s3 + $0x30] sm:$0xf]
  %v335 = vld [vmem:[%s3 + $0x34] sm:$0xf]
  %v336 = vld [vmem:[%s3 + $0x38] sm:$0xf]
  %v337 = vld [vmem:[%s3 + $0x3c] sm:$0xf]
  %v338 = vpack.c.bf16 %v307, %v306
  %v339 = vpack.c.bf16 %v309, %v308
  %v340 = vpack.c.bf16 %v311, %v310
  %v341 = vpack.c.bf16 %v313, %v312
  %v342 = vpack.c.bf16 %v315, %v314
  %v343 = vpack.c.bf16 %v317, %v316
  %v344 = vpack.c.bf16 %v319, %v318
  %v345 = vpack.c.bf16 %v321, %v320
  %v346 = vld [vmem:[%s4] sm:$0xff]
  %v347 = vld [vmem:[%s4 + $0x8] sm:$0xff]
  %v348 = vld [vmem:[%s4 + $0x10] sm:$0xff]
  %v349 = vld [vmem:[%s4 + $0x18] sm:$0xff]
  %v350 = vld [vmem:[%s4 + $0x20] sm:$0xff]
  %v351 = vld [vmem:[%s4 + $0x28] sm:$0xff]
  %v352 = vld [vmem:[%s4 + $0x30] sm:$0xff]
  %v353 = vld [vmem:[%s4 + $0x38] sm:$0xff]
  %v354 = vld [vmem:[%s4 + $0x40] sm:$0xff]
  %v355 = vld [vmem:[%s4 + $0x48] sm:$0xff]
  %v356 = vld [vmem:[%s4 + $0x50] sm:$0xff]
  %v357 = vld [vmem:[%s4 + $0x58] sm:$0xff]
  %v358 = vld [vmem:[%s4 + $0x60] sm:$0xff]
  %v359 = vld [vmem:[%s4 + $0x68] sm:$0xff]
  %v360 = vld [vmem:[%s4 + $0x70] sm:$0xff]
  %v361 = vld [vmem:[%s4 + $0x78] sm:$0xff]
  %363 = vset.pattern.permute.xlu0 0
  %364 = vperm.xlu0 %363, %v346
  %v365 = vpop.permute.xlu0 %364
  %368 = vset.pattern.permute.xlu0 0
  %369 = vperm.xlu0 %368, %v347
  %v370 = vpop.permute.xlu0 %369
  %373 = vset.pattern.permute.xlu0 0
  %374 = vperm.xlu0 %373, %v348
  %v375 = vpop.permute.xlu0 %374
  %378 = vset.pattern.permute.xlu0 0
  %379 = vperm.xlu0 %378, %v349
  %v380 = vpop.permute.xlu0 %379
  %383 = vset.pattern.permute.xlu0 0
  %384 = vperm.xlu0 %383, %v350
  %v385 = vpop.permute.xlu0 %384
  %388 = vset.pattern.permute.xlu0 0
  %389 = vperm.xlu0 %388, %v351
  %v390 = vpop.permute.xlu0 %389
  %393 = vset.pattern.permute.xlu0 0
  %394 = vperm.xlu0 %393, %v352
  %v395 = vpop.permute.xlu0 %394
  %398 = vset.pattern.permute.xlu0 0
  %399 = vperm.xlu0 %398, %v353
  %v400 = vpop.permute.xlu0 %399
  %403 = vset.pattern.permute.xlu0 0
  %404 = vperm.xlu0 %403, %v354
  %v405 = vpop.permute.xlu0 %404
  %408 = vset.pattern.permute.xlu0 0
  %409 = vperm.xlu0 %408, %v355
  %v410 = vpop.permute.xlu0 %409
  %413 = vset.pattern.permute.xlu0 0
  %414 = vperm.xlu0 %413, %v356
  %v415 = vpop.permute.xlu0 %414
  %418 = vset.pattern.permute.xlu0 0
  %419 = vperm.xlu0 %418, %v357
  %v420 = vpop.permute.xlu0 %419
  %423 = vset.pattern.permute.xlu0 0
  %424 = vperm.xlu0 %423, %v358
  %v425 = vpop.permute.xlu0 %424
  %428 = vset.pattern.permute.xlu0 0
  %429 = vperm.xlu0 %428, %v359
  %v430 = vpop.permute.xlu0 %429
  %433 = vset.pattern.permute.xlu0 0
  %434 = vperm.xlu0 %433, %v360
  %v435 = vpop.permute.xlu0 %434
  %438 = vset.pattern.permute.xlu0 0
  %439 = vperm.xlu0 %438, %v361
  %v440 = vpop.permute.xlu0 %439
  %v458 = vunpack.c.l.b16 %v322
  %v459 = vunpack.c.l.b16 %v323
  %v460 = vunpack.c.l.b16 %v324
  %v461 = vunpack.c.l.b16 %v325
  %v462 = vunpack.c.l.b16 %v326
  %v463 = vunpack.c.l.b16 %v327
  %v464 = vunpack.c.l.b16 %v328
  %v465 = vunpack.c.l.b16 %v329
  %v466 = vunpack.c.l.b16 %v330
  %v467 = vunpack.c.l.b16 %v331
  %v468 = vunpack.c.l.b16 %v332
  %v469 = vunpack.c.l.b16 %v333
  %v470 = vunpack.c.l.b16 %v334
  %v471 = vunpack.c.l.b16 %v335
  %v472 = vunpack.c.l.b16 %v336
  %v473 = vunpack.c.l.b16 %v337
  %v474 = vpack.c.b16 %v459, %v458
  %v475 = vpack.c.b16 %v461, %v460
  %v476 = vpack.c.b16 %v463, %v462
  %v477 = vpack.c.b16 %v465, %v464
  %v478 = vpack.c.b16 %v467, %v466
  %v479 = vpack.c.b16 %v469, %v468
  %v480 = vpack.c.b16 %v471, %v470
  %v481 = vpack.c.b16 %v473, %v472
  %490 = vmatprep.subr.bf16.mxu0 0
  %491 = vmatpush1.bf16.msra.mxu0 %v345
  %492 = vmatprep.subr.bf16.mxu0 0
  %493 = vmatpush1.bf16.msra.mxu0 %v344
  %494 = vmatprep.subr.bf16.mxu0 0
  %495 = vmatpush1.bf16.msra.mxu0 %v343
  %496 = vmatprep.subr.bf16.mxu0 0
  %497 = vmatpush1.bf16.msra.mxu0 %v342
  %498 = vmatprep.subr.bf16.mxu0 0
  %499 = vmatpush1.bf16.msra.mxu0 %v341
  %500 = vmatprep.subr.bf16.mxu0 0
  %501 = vmatpush1.bf16.msra.mxu0 %v340
  %502 = vmatprep.subr.bf16.mxu0 0
  %503 = vmatpush1.bf16.msra.mxu0 %v339
  %504 = vmatprep.subr.bf16.mxu0 0
  %505 = vmatpush1.bf16.msra.mxu0 %v338
  %506 = vmatprep.subr.bf16.mxu0 0
  %507 = vmatpush2.bf16.msra.mxu0 0
  %508 = vmatprep.subr.bf16.mxu0 0
  %509 = vmatpush2.bf16.msra.mxu0 0
  %510 = vmatprep.subr.bf16.mxu0 0
  %511 = vmatpush2.bf16.msra.mxu0 0
  %512 = vmatprep.subr.bf16.mxu0 0
  %513 = vmatpush2.bf16.msra.mxu0 0
  %514 = vmatprep.subr.bf16.mxu0 0
  %515 = vmatpush2.bf16.msra.mxu0 0
  %516 = vmatprep.subr.bf16.mxu0 0
  %517 = vmatpush2.bf16.msra.mxu0 0
  %518 = vmatprep.subr.bf16.mxu0 0
  %519 = vmatpush2.bf16.msra.mxu0 0
  %520 = vmatprep.subr.bf16.mxu0 0
  %521 = vmatpush2.bf16.msra.mxu0 0
  %522 = vmatprep.mubr.bf16.mxu0 0
  %523 = vmatmul.mubr.bf16.gmra.mxu0 %v474
  %v524 = vpop.f32.mrf.mxu0
  %v525 = vadd.f32 %v365, %v524
  %v526 = vpop.f32.mrf.mxu0
  %v527 = vpop.f32.mrf.mxu0
  %v528 = vadd.f32 %v370, %v527
  %v529 = vpop.f32.mrf.mxu0
  %530 = vmatprep.mubr.bf16.mxu0 0
  %531 = vmatmul.mubr.bf16.gmra.mxu0 %v475
  %v532 = vpop.f32.mrf.mxu0
  %v533 = vadd.f32 %v375, %v532
  %v534 = vpop.f32.mrf.mxu0
  %v535 = vpop.f32.mrf.mxu0
  %v536 = vadd.f32 %v380, %v535
  %v537 = vpop.f32.mrf.mxu0
  %538 = vmatprep.mubr.bf16.mxu0 0
  %539 = vmatmul.mubr.bf16.gmra.mxu0 %v476
  %v540 = vpop.f32.mrf.mxu0
  %v541 = vadd.f32 %v385, %v540
  %v542 = vpop.f32.mrf.mxu0
  %v543 = vpop.f32.mrf.mxu0
  %v544 = vadd.f32 %v390, %v543
  %v545 = vpop.f32.mrf.mxu0
  %546 = vmatprep.mubr.bf16.mxu0 0
  %547 = vmatmul.mubr.bf16.gmra.mxu0 %v477
  %v548 = vpop.f32.mrf.mxu0
  %v549 = vadd.f32 %v395, %v548
  %v550 = vpop.f32.mrf.mxu0
  %v551 = vpop.f32.mrf.mxu0
  %v552 = vadd.f32 %v400, %v551
  %v553 = vpop.f32.mrf.mxu0
  %554 = vmatprep.mubr.bf16.mxu0 0
  %555 = vmatmul.mubr.bf16.gmra.mxu0 %v478
  %v556 = vpop.f32.mrf.mxu0
  %v557 = vadd.f32 %v405, %v556
  %v558 = vpop.f32.mrf.mxu0
  %v559 = vpop.f32.mrf.mxu0
  %v560 = vadd.f32 %v410, %v559
  %v561 = vpop.f32.mrf.mxu0
  %562 = vmatprep.mubr.bf16.mxu0 0
  %563 = vmatmul.mubr.bf16.gmra.mxu0 %v479
  %v564 = vpop.f32.mrf.mxu0
  %v565 = vadd.f32 %v415, %v564
  %v566 = vpop.f32.mrf.mxu0
  %v567 = vpop.f32.mrf.mxu0
  %v568 = vadd.f32 %v420, %v567
  %v569 = vpop.f32.mrf.mxu0
  %570 = vmatprep.mubr.bf16.mxu0 0
  %571 = vmatmul.mubr.bf16.gmra.mxu0 %v480
  %v572 = vpop.f32.mrf.mxu0
  %v573 = vadd.f32 %v425, %v572
  %v574 = vpop.f32.mrf.mxu0
  %v575 = vpop.f32.mrf.mxu0
  %v576 = vadd.f32 %v430, %v575
  %v577 = vpop.f32.mrf.mxu0
  %578 = vmatprep.mubr.bf16.mxu0 0
  %579 = vmatmul.mubr.bf16.gmra.mxu0 %v481
  %v580 = vpop.f32.mrf.mxu0
  %v581 = vadd.f32 %v435, %v580
  %v582 = vpop.f32.mrf.mxu0
  %v583 = vpop.f32.mrf.mxu0
  %v584 = vadd.f32 %v440, %v583
  %v585 = vpop.f32.mrf.mxu0
  %586 = vdwg.mxu0
  %v587 = vmax.f32 %v525, 0.0
  %v588 = vmax.f32 %v528, 0.0
  %v589 = vmax.f32 %v533, 0.0
  %v590 = vmax.f32 %v536, 0.0
  %v591 = vmax.f32 %v541, 0.0
  %v592 = vmax.f32 %v544, 0.0
  %v593 = vmax.f32 %v549, 0.0
  %v594 = vmax.f32 %v552, 0.0
  %v595 = vmax.f32 %v557, 0.0
  %v596 = vmax.f32 %v560, 0.0
  %v597 = vmax.f32 %v565, 0.0
  %v598 = vmax.f32 %v568, 0.0
  %v599 = vmax.f32 %v573, 0.0
  %v600 = vmax.f32 %v576, 0.0
  %v601 = vmax.f32 %v581, 0.0
  %v602 = vmax.f32 %v584, 0.0
  %v603 = vld [vmem:[%s5] sm:$0xf]
  %v604 = vld [vmem:[%s5 + $0x4] sm:$0xf]
  %v605 = vld [vmem:[%s5 + $0x8] sm:$0xf]
  %v606 = vld [vmem:[%s5 + $0xc] sm:$0xf]
  %v607 = vld [vmem:[%s5 + $0x10] sm:$0xf]
  %v608 = vld [vmem:[%s5 + $0x14] sm:$0xf]
  %v609 = vld [vmem:[%s5 + $0x18] sm:$0xf]
  %v610 = vld [vmem:[%s5 + $0x1c] sm:$0xf]
  %v611 = vld [vmem:[%s5 + $0x20] sm:$0xf]
  %v612 = vld [vmem:[%s5 + $0x24] sm:$0xf]
  %v613 = vld [vmem:[%s5 + $0x28] sm:$0xf]
  %v614 = vld [vmem:[%s5 + $0x2c] sm:$0xf]
  %v615 = vld [vmem:[%s5 + $0x30] sm:$0xf]
  %v616 = vld [vmem:[%s5 + $0x34] sm:$0xf]
  %v617 = vld [vmem:[%s5 + $0x38] sm:$0xf]
  %v618 = vld [vmem:[%s5 + $0x3c] sm:$0xf]
  %v619 = vpack.c.bf16 %v588, %v587
  %v620 = vpack.c.bf16 %v590, %v589
  %v621 = vpack.c.bf16 %v592, %v591
  %v622 = vpack.c.bf16 %v594, %v593
  %v623 = vpack.c.bf16 %v596, %v595
  %v624 = vpack.c.bf16 %v598, %v597
  %v625 = vpack.c.bf16 %v600, %v599
  %v626 = vpack.c.bf16 %v602, %v601
  %v627 = vld [vmem:[%s6] sm:$0xff]
  %v628 = vld [vmem:[%s6 + $0x8] sm:$0xff]
  %v629 = vld [vmem:[%s6 + $0x10] sm:$0xff]
  %v630 = vld [vmem:[%s6 + $0x18] sm:$0xff]
  %v631 = vld [vmem:[%s6 + $0x20] sm:$0xff]
  %v632 = vld [vmem:[%s6 + $0x28] sm:$0xff]
  %v633 = vld [vmem:[%s6 + $0x30] sm:$0xff]
  %v634 = vld [vmem:[%s6 + $0x38] sm:$0xff]
  %v635 = vld [vmem:[%s6 + $0x40] sm:$0xff]
  %v636 = vld [vmem:[%s6 + $0x48] sm:$0xff]
  %v637 = vld [vmem:[%s6 + $0x50] sm:$0xff]
  %v638 = vld [vmem:[%s6 + $0x58] sm:$0xff]
  %v639 = vld [vmem:[%s6 + $0x60] sm:$0xff]
  %v640 = vld [vmem:[%s6 + $0x68] sm:$0xff]
  %v641 = vld [vmem:[%s6 + $0x70] sm:$0xff]
  %v642 = vld [vmem:[%s6 + $0x78] sm:$0xff]
  %644 = vset.pattern.permute.xlu0 0
  %645 = vperm.xlu0 %644, %v627
  %v646 = vpop.permute.xlu0 %645
  %649 = vset.pattern.permute.xlu0 0
  %650 = vperm.xlu0 %649, %v628
  %v651 = vpop.permute.xlu0 %650
  %654 = vset.pattern.permute.xlu0 0
  %655 = vperm.xlu0 %654, %v629
  %v656 = vpop.permute.xlu0 %655
  %659 = vset.pattern.permute.xlu0 0
  %660 = vperm.xlu0 %659, %v630
  %v661 = vpop.permute.xlu0 %660
  %664 = vset.pattern.permute.xlu0 0
  %665 = vperm.xlu0 %664, %v631
  %v666 = vpop.permute.xlu0 %665
  %669 = vset.pattern.permute.xlu0 0
  %670 = vperm.xlu0 %669, %v632
  %v671 = vpop.permute.xlu0 %670
  %674 = vset.pattern.permute.xlu0 0
  %675 = vperm.xlu0 %674, %v633
  %v676 = vpop.permute.xlu0 %675
  %679 = vset.pattern.permute.xlu0 0
  %680 = vperm.xlu0 %679, %v634
  %v681 = vpop.permute.xlu0 %680
  %684 = vset.pattern.permute.xlu0 0
  %685 = vperm.xlu0 %684, %v635
  %v686 = vpop.permute.xlu0 %685
  %689 = vset.pattern.permute.xlu0 0
  %690 = vperm.xlu0 %689, %v636
  %v691 = vpop.permute.xlu0 %690
  %694 = vset.pattern.permute.xlu0 0
  %695 = vperm.xlu0 %694, %v637
  %v696 = vpop.permute.xlu0 %695
  %699 = vset.pattern.permute.xlu0 0
  %700 = vperm.xlu0 %699, %v638
  %v701 = vpop.permute.xlu0 %700
  %704 = vset.pattern.permute.xlu0 0
  %705 = vperm.xlu0 %704, %v639
  %v706 = vpop.permute.xlu0 %705
  %709 = vset.pattern.permute.xlu0 0
  %710 = vperm.xlu0 %709, %v640
  %v711 = vpop.permute.xlu0 %710
  %714 = vset.pattern.permute.xlu0 0
  %715 = vperm.xlu0 %714, %v641
  %v716 = vpop.permute.xlu0 %715
  %719 = vset.pattern.permute.xlu0 0
  %720 = vperm.xlu0 %719, %v642
  %v721 = vpop.permute.xlu0 %720
  %v739 = vunpack.c.l.b16 %v603
  %v740 = vunpack.c.l.b16 %v604
  %v741 = vunpack.c.l.b16 %v605
  %v742 = vunpack.c.l.b16 %v606
  %v743 = vunpack.c.l.b16 %v607
  %v744 = vunpack.c.l.b16 %v608
  %v745 = vunpack.c.l.b16 %v609
  %v746 = vunpack.c.l.b16 %v610
  %v747 = vunpack.c.l.b16 %v611
  %v748 = vunpack.c.l.b16 %v612
  %v749 = vunpack.c.l.b16 %v613
  %v750 = vunpack.c.l.b16 %v614
  %v751 = vunpack.c.l.b16 %v615
  %v752 = vunpack.c.l.b16 %v616
  %v753 = vunpack.c.l.b16 %v617
  %v754 = vunpack.c.l.b16 %v618
  %v755 = vpack.c.b16 %v740, %v739
  %v756 = vpack.c.b16 %v742, %v741
  %v757 = vpack.c.b16 %v744, %v743
  %v758 = vpack.c.b16 %v746, %v745
  %v759 = vpack.c.b16 %v748, %v747
  %v760 = vpack.c.b16 %v750, %v749
  %v761 = vpack.c.b16 %v752, %v751
  %v762 = vpack.c.b16 %v754, %v753
  %771 = vmatprep.subr.bf16.mxu0 0
  %772 = vmatpush1.bf16.msra.mxu0 %v626
  %773 = vmatprep.subr.bf16.mxu0 0
  %774 = vmatpush1.bf16.msra.mxu0 %v625
  %775 = vmatprep.subr.bf16.mxu0 0
  %776 = vmatpush1.bf16.msra.mxu0 %v624
  %777 = vmatprep.subr.bf16.mxu0 0
  %778 = vmatpush1.bf16.msra.mxu0 %v623
  %779 = vmatprep.subr.bf16.mxu0 0
  %780 = vmatpush1.bf16.msra.mxu0 %v622
  %781 = vmatprep.subr.bf16.mxu0 0
  %782 = vmatpush1.bf16.msra.mxu0 %v621
  %783 = vmatprep.subr.bf16.mxu0 0
  %784 = vmatpush1.bf16.msra.mxu0 %v620
  %785 = vmatprep.subr.bf16.mxu0 0
  %786 = vmatpush1.bf16.msra.mxu0 %v619
  %787 = vmatprep.subr.bf16.mxu0 0
  %788 = vmatpush2.bf16.msra.mxu0 0
  %789 = vmatprep.subr.bf16.mxu0 0
  %790 = vmatpush2.bf16.msra.mxu0 0
  %791 = vmatprep.subr.bf16.mxu0 0
  %792 = vmatpush2.bf16.msra.mxu0 0
  %793 = vmatprep.subr.bf16.mxu0 0
  %794 = vmatpush2.bf16.msra.mxu0 0
  %795 = vmatprep.subr.bf16.mxu0 0
  %796 = vmatpush2.bf16.msra.mxu0 0
  %797 = vmatprep.subr.bf16.mxu0 0
  %798 = vmatpush2.bf16.msra.mxu0 0
  %799 = vmatprep.subr.bf16.mxu0 0
  %800 = vmatpush2.bf16.msra.mxu0 0
  %801 = vmatprep.subr.bf16.mxu0 0
  %802 = vmatpush2.bf16.msra.mxu0 0
  %803 = vmatprep.mubr.bf16.mxu0 0
  %804 = vmatmul.mubr.bf16.gmra.mxu0 %v755
  %v805 = vpop.f32.mrf.mxu0
  %v806 = vadd.f32 %v646, %v805
  %v807 = vpop.f32.mrf.mxu0
  %v808 = vpop.f32.mrf.mxu0
  %v809 = vadd.f32 %v651, %v808
  %v810 = vpop.f32.mrf.mxu0
  %811 = vmatprep.mubr.bf16.mxu0 0
  %812 = vmatmul.mubr.bf16.gmra.mxu0 %v756
  %v813 = vpop.f32.mrf.mxu0
  %v814 = vadd.f32 %v656, %v813
  %v815 = vpop.f32.mrf.mxu0
  %v816 = vpop.f32.mrf.mxu0
  %v817 = vadd.f32 %v661, %v816
  %v818 = vpop.f32.mrf.mxu0
  %819 = vmatprep.mubr.bf16.mxu0 0
  %820 = vmatmul.mubr.bf16.gmra.mxu0 %v757
  %v821 = vpop.f32.mrf.mxu0
  %v822 = vadd.f32 %v666, %v821
  %v823 = vpop.f32.mrf.mxu0
  %v824 = vpop.f32.mrf.mxu0
  %v825 = vadd.f32 %v671, %v824
  %v826 = vpop.f32.mrf.mxu0
  %827 = vmatprep.mubr.bf16.mxu0 0
  %828 = vmatmul.mubr.bf16.gmra.mxu0 %v758
  %v829 = vpop.f32.mrf.mxu0
  %v830 = vadd.f32 %v676, %v829
  %v831 = vpop.f32.mrf.mxu0
  %v832 = vpop.f32.mrf.mxu0
  %v833 = vadd.f32 %v681, %v832
  %v834 = vpop.f32.mrf.mxu0
  %835 = vmatprep.mubr.bf16.mxu0 0
  %836 = vmatmul.mubr.bf16.gmra.mxu0 %v759
  %v837 = vpop.f32.mrf.mxu0
  %v838 = vadd.f32 %v686, %v837
  %v839 = vpop.f32.mrf.mxu0
  %v840 = vpop.f32.mrf.mxu0
  %v841 = vadd.f32 %v691, %v840
  %v842 = vpop.f32.mrf.mxu0
  %843 = vmatprep.mubr.bf16.mxu0 0
  %844 = vmatmul.mubr.bf16.gmra.mxu0 %v760
  %v845 = vpop.f32.mrf.mxu0
  %v846 = vadd.f32 %v696, %v845
  %v847 = vpop.f32.mrf.mxu0
  %v848 = vpop.f32.mrf.mxu0
  %v849 = vadd.f32 %v701, %v848
  %v850 = vpop.f32.mrf.mxu0
  %851 = vmatprep.mubr.bf16.mxu0 0
  %852 = vmatmul.mubr.bf16.gmra.mxu0 %v761
  %v853 = vpop.f32.mrf.mxu0
  %v854 = vadd.f32 %v706, %v853
  %v855 = vpop.f32.mrf.mxu0
  %v856 = vpop.f32.mrf.mxu0
  %v857 = vadd.f32 %v711, %v856
  %v858 = vpop.f32.mrf.mxu0
  %859 = vmatprep.mubr.bf16.mxu0 0
  %860 = vmatmul.mubr.bf16.gmra.mxu0 %v762
  %v861 = vpop.f32.mrf.mxu0
  %v862 = vadd.f32 %v716, %v861
  %v863 = vpop.f32.mrf.mxu0
  %v864 = vpop.f32.mrf.mxu0
  %v865 = vadd.f32 %v721, %v864
  %v866 = vpop.f32.mrf.mxu0
  %867 = vdwg.mxu0
  %v868 = vmax.f32 %v806, 0.0
  %v869 = vmax.f32 %v809, 0.0
  %v870 = vmax.f32 %v814, 0.0
  %v871 = vmax.f32 %v817, 0.0
  %v872 = vmax.f32 %v822, 0.0
  %v873 = vmax.f32 %v825, 0.0
  %v874 = vmax.f32 %v830, 0.0
  %v875 = vmax.f32 %v833, 0.0
  %v876 = vmax.f32 %v838, 0.0
  %v877 = vmax.f32 %v841, 0.0
  %v878 = vmax.f32 %v846, 0.0
  %v879 = vmax.f32 %v849, 0.0
  %v880 = vmax.f32 %v854, 0.0
  %v881 = vmax.f32 %v857, 0.0
  %v882 = vmax.f32 %v862, 0.0
  %v883 = vmax.f32 %v865, 0.0
  %v884 = vld [vmem:[%s7] sm:$0xf]
  %v885 = vld [vmem:[%s7 + $0x4] sm:$0xf]
  %v886 = vld [vmem:[%s7 + $0x8] sm:$0xf]
  %v887 = vld [vmem:[%s7 + $0xc] sm:$0xf]
  %v888 = vld [vmem:[%s7 + $0x10] sm:$0xf]
  %v889 = vld [vmem:[%s7 + $0x14] sm:$0xf]
  %v890 = vld [vmem:[%s7 + $0x18] sm:$0xf]
  %v891 = vld [vmem:[%s7 + $0x1c] sm:$0xf]
  %v892 = vld [vmem:[%s7 + $0x20] sm:$0xf]
  %v893 = vld [vmem:[%s7 + $0x24] sm:$0xf]
  %v894 = vld [vmem:[%s7 + $0x28] sm:$0xf]
  %v895 = vld [vmem:[%s7 + $0x2c] sm:$0xf]
  %v896 = vld [vmem:[%s7 + $0x30] sm:$0xf]
  %v897 = vld [vmem:[%s7 + $0x34] sm:$0xf]
  %v898 = vld [vmem:[%s7 + $0x38] sm:$0xf]
  %v899 = vld [vmem:[%s7 + $0x3c] sm:$0xf]
  %v900 = vpack.c.bf16 %v869, %v868
  %v901 = vpack.c.bf16 %v871, %v870
  %v902 = vpack.c.bf16 %v873, %v872
  %v903 = vpack.c.bf16 %v875, %v874
  %v904 = vpack.c.bf16 %v877, %v876
  %v905 = vpack.c.bf16 %v879, %v878
  %v906 = vpack.c.bf16 %v881, %v880
  %v907 = vpack.c.bf16 %v883, %v882
  %v908 = vld [vmem:[%s8] sm:$0xff]
  %v909 = vld [vmem:[%s8 + $0x8] sm:$0xff]
  %v910 = vld [vmem:[%s8 + $0x10] sm:$0xff]
  %v911 = vld [vmem:[%s8 + $0x18] sm:$0xff]
  %v912 = vld [vmem:[%s8 + $0x20] sm:$0xff]
  %v913 = vld [vmem:[%s8 + $0x28] sm:$0xff]
  %v914 = vld [vmem:[%s8 + $0x30] sm:$0xff]
  %v915 = vld [vmem:[%s8 + $0x38] sm:$0xff]
  %v916 = vld [vmem:[%s8 + $0x40] sm:$0xff]
  %v917 = vld [vmem:[%s8 + $0x48] sm:$0xff]
  %v918 = vld [vmem:[%s8 + $0x50] sm:$0xff]
  %v919 = vld [vmem:[%s8 + $0x58] sm:$0xff]
  %v920 = vld [vmem:[%s8 + $0x60] sm:$0xff]
  %v921 = vld [vmem:[%s8 + $0x68] sm:$0xff]
  %v922 = vld [vmem:[%s8 + $0x70] sm:$0xff]
  %v923 = vld [vmem:[%s8 + $0x78] sm:$0xff]
  %925 = vset.pattern.permute.xlu0 0
  %926 = vperm.xlu0 %925, %v908
  %v927 = vpop.permute.xlu0 %926
  %930 = vset.pattern.permute.xlu0 0
  %931 = vperm.xlu0 %930, %v909
  %v932 = vpop.permute.xlu0 %931
  %935 = vset.pattern.permute.xlu0 0
  %936 = vperm.xlu0 %935, %v910
  %v937 = vpop.permute.xlu0 %936
  %940 = vset.pattern.permute.xlu0 0
  %941 = vperm.xlu0 %940, %v911
  %v942 = vpop.permute.xlu0 %941
  %945 = vset.pattern.permute.xlu0 0
  %946 = vperm.xlu0 %945, %v912
  %v947 = vpop.permute.xlu0 %946
  %950 = vset.pattern.permute.xlu0 0
  %951 = vperm.xlu0 %950, %v913
  %v952 = vpop.permute.xlu0 %951
  %955 = vset.pattern.permute.xlu0 0
  %956 = vperm.xlu0 %955, %v914
  %v957 = vpop.permute.xlu0 %956
  %960 = vset.pattern.permute.xlu0 0
  %961 = vperm.xlu0 %960, %v915
  %v962 = vpop.permute.xlu0 %961
  %965 = vset.pattern.permute.xlu0 0
  %966 = vperm.xlu0 %965, %v916
  %v967 = vpop.permute.xlu0 %966
  %970 = vset.pattern.permute.xlu0 0
  %971 = vperm.xlu0 %970, %v917
  %v972 = vpop.permute.xlu0 %971
  %975 = vset.pattern.permute.xlu0 0
  %976 = vperm.xlu0 %975, %v918
  %v977 = vpop.permute.xlu0 %976
  %980 = vset.pattern.permute.xlu0 0
  %981 = vperm.xlu0 %980, %v919
  %v982 = vpop.permute.xlu0 %981
  %985 = vset.pattern.permute.xlu0 0
  %986 = vperm.xlu0 %985, %v920
  %v987 = vpop.permute.xlu0 %986
  %990 = vset.pattern.permute.xlu0 0
  %991 = vperm.xlu0 %990, %v921
  %v992 = vpop.permute.xlu0 %991
  %995 = vset.pattern.permute.xlu0 0
  %996 = vperm.xlu0 %995, %v922
  %v997 = vpop.permute.xlu0 %996
  %1000 = vset.pattern.permute.xlu0 0
  %1001 = vperm.xlu0 %1000, %v923
  %v1002 = vpop.permute.xlu0 %1001
  %v1020 = vunpack.c.l.b16 %v884
  %v1021 = vunpack.c.l.b16 %v885
  %v1022 = vunpack.c.l.b16 %v886
  %v1023 = vunpack.c.l.b16 %v887
  %v1024 = vunpack.c.l.b16 %v888
  %v1025 = vunpack.c.l.b16 %v889
  %v1026 = vunpack.c.l.b16 %v890
  %v1027 = vunpack.c.l.b16 %v891
  %v1028 = vunpack.c.l.b16 %v892
  %v1029 = vunpack.c.l.b16 %v893
  %v1030 = vunpack.c.l.b16 %v894
  %v1031 = vunpack.c.l.b16 %v895
  %v1032 = vunpack.c.l.b16 %v896
  %v1033 = vunpack.c.l.b16 %v897
  %v1034 = vunpack.c.l.b16 %v898
  %v1035 = vunpack.c.l.b16 %v899
  %v1036 = vpack.c.b16 %v1021, %v1020
  %v1037 = vpack.c.b16 %v1023, %v1022
  %v1038 = vpack.c.b16 %v1025, %v1024
  %v1039 = vpack.c.b16 %v1027, %v1026
  %v1040 = vpack.c.b16 %v1029, %v1028
  %v1041 = vpack.c.b16 %v1031, %v1030
  %v1042 = vpack.c.b16 %v1033, %v1032
  %v1043 = vpack.c.b16 %v1035, %v1034
  %1052 = vmatprep.subr.bf16.mxu0 0
  %1053 = vmatpush1.bf16.msra.mxu0 %v907
  %1054 = vmatprep.subr.bf16.mxu0 0
  %1055 = vmatpush1.bf16.msra.mxu0 %v906
  %1056 = vmatprep.subr.bf16.mxu0 0
  %1057 = vmatpush1.bf16.msra.mxu0 %v905
  %1058 = vmatprep.subr.bf16.mxu0 0
  %1059 = vmatpush1.bf16.msra.mxu0 %v904
  %1060 = vmatprep.subr.bf16.mxu0 0
  %1061 = vmatpush1.bf16.msra.mxu0 %v903
  %1062 = vmatprep.subr.bf16.mxu0 0
  %1063 = vmatpush1.bf16.msra.mxu0 %v902
  %1064 = vmatprep.subr.bf16.mxu0 0
  %1065 = vmatpush1.bf16.msra.mxu0 %v901
  %1066 = vmatprep.subr.bf16.mxu0 0
  %1067 = vmatpush1.bf16.msra.mxu0 %v900
  %1068 = vmatprep.subr.bf16.mxu0 0
  %1069 = vmatpush2.bf16.msra.mxu0 0
  %1070 = vmatprep.subr.bf16.mxu0 0
  %1071 = vmatpush2.bf16.msra.mxu0 0
  %1072 = vmatprep.subr.bf16.mxu0 0
  %1073 = vmatpush2.bf16.msra.mxu0 0
  %1074 = vmatprep.subr.bf16.mxu0 0
  %1075 = vmatpush2.bf16.msra.mxu0 0
  %1076 = vmatprep.subr.bf16.mxu0 0
  %1077 = vmatpush2.bf16.msra.mxu0 0
  %1078 = vmatprep.subr.bf16.mxu0 0
  %1079 = vmatpush2.bf16.msra.mxu0 0
  %1080 = vmatprep.subr.bf16.mxu0 0
  %1081 = vmatpush2.bf16.msra.mxu0 0
  %1082 = vmatprep.subr.bf16.mxu0 0
  %1083 = vmatpush2.bf16.msra.mxu0 0
  %1084 = vmatprep.mubr.bf16.mxu0 0
  %1085 = vmatmul.mubr.bf16.gmra.mxu0 %v1036
  %v1086 = vpop.f32.mrf.mxu0
  %v1087 = vadd.f32 %v927, %v1086
  %v1088 = vpop.f32.mrf.mxu0
  %v1089 = vpop.f32.mrf.mxu0
  %v1090 = vadd.f32 %v932, %v1089
  %v1091 = vpop.f32.mrf.mxu0
  %1092 = vmatprep.mubr.bf16.mxu0 0
  %1093 = vmatmul.mubr.bf16.gmra.mxu0 %v1037
  %v1094 = vpop.f32.mrf.mxu0
  %v1095 = vadd.f32 %v937, %v1094
  %v1096 = vpop.f32.mrf.mxu0
  %v1097 = vpop.f32.mrf.mxu0
  %v1098 = vadd.f32 %v942, %v1097
  %v1099 = vpop.f32.mrf.mxu0
  %1100 = vmatprep.mubr.bf16.mxu0 0
  %1101 = vmatmul.mubr.bf16.gmra.mxu0 %v1038
  %v1102 = vpop.f32.mrf.mxu0
  %v1103 = vadd.f32 %v947, %v1102
  %v1104 = vpop.f32.mrf.mxu0
  %v1105 = vpop.f32.mrf.mxu0
  %v1106 = vadd.f32 %v952, %v1105
  %v1107 = vpop.f32.mrf.mxu0
  %1108 = vmatprep.mubr.bf16.mxu0 0
  %1109 = vmatmul.mubr.bf16.gmra.mxu0 %v1039
  %v1110 = vpop.f32.mrf.mxu0
  %v1111 = vadd.f32 %v957, %v1110
  %v1112 = vpop.f32.mrf.mxu0
  %v1113 = vpop.f32.mrf.mxu0
  %v1114 = vadd.f32 %v962, %v1113
  %v1115 = vpop.f32.mrf.mxu0
  %1116 = vmatprep.mubr.bf16.mxu0 0
  %1117 = vmatmul.mubr.bf16.gmra.mxu0 %v1040
  %v1118 = vpop.f32.mrf.mxu0
  %v1119 = vadd.f32 %v967, %v1118
  %v1120 = vpop.f32.mrf.mxu0
  %v1121 = vpop.f32.mrf.mxu0
  %v1122 = vadd.f32 %v972, %v1121
  %v1123 = vpop.f32.mrf.mxu0
  %1124 = vmatprep.mubr.bf16.mxu0 0
  %1125 = vmatmul.mubr.bf16.gmra.mxu0 %v1041
  %v1126 = vpop.f32.mrf.mxu0
  %v1127 = vadd.f32 %v977, %v1126
  %v1128 = vpop.f32.mrf.mxu0
  %v1129 = vpop.f32.mrf.mxu0
  %v1130 = vadd.f32 %v982, %v1129
  %v1131 = vpop.f32.mrf.mxu0
  %1132 = vmatprep.mubr.bf16.mxu0 0
  %1133 = vmatmul.mubr.bf16.gmra.mxu0 %v1042
  %v1134 = vpop.f32.mrf.mxu0
  %v1135 = vadd.f32 %v987, %v1134
  %v1136 = vpop.f32.mrf.mxu0
  %v1137 = vpop.f32.mrf.mxu0
  %v1138 = vadd.f32 %v992, %v1137
  %v1139 = vpop.f32.mrf.mxu0
  %1140 = vmatprep.mubr.bf16.mxu0 0
  %1141 = vmatmul.mubr.bf16.gmra.mxu0 %v1043
  %v1142 = vpop.f32.mrf.mxu0
  %v1143 = vadd.f32 %v997, %v1142
  %v1144 = vpop.f32.mrf.mxu0
  %v1145 = vpop.f32.mrf.mxu0
  %v1146 = vadd.f32 %v1002, %v1145
  %v1147 = vpop.f32.mrf.mxu0
  %1148 = vdwg.mxu0
  %v1149 = vmax.f32 %v1087, 0.0
  %v1150 = vmax.f32 %v1090, 0.0
  %v1151 = vmax.f32 %v1095, 0.0
  %v1152 = vmax.f32 %v1098, 0.0
  %v1153 = vmax.f32 %v1103, 0.0
  %v1154 = vmax.f32 %v1106, 0.0
  %v1155 = vmax.f32 %v1111, 0.0
  %v1156 = vmax.f32 %v1114, 0.0
  %v1157 = vmax.f32 %v1119, 0.0
  %v1158 = vmax.f32 %v1122, 0.0
  %v1159 = vmax.f32 %v1127, 0.0
  %v1160 = vmax.f32 %v1130, 0.0
  %v1161 = vmax.f32 %v1135, 0.0
  %v1162 = vmax.f32 %v1138, 0.0
  %v1163 = vmax.f32 %v1143, 0.0
  %v1164 = vmax.f32 %v1146, 0.0
  %v1165 = vld [vmem:[%s9] sm:$0xff]
  %v1166 = vld [vmem:[%s9 + $0x8] sm:$0xff]
  %v1167 = vld [vmem:[%s9 + $0x10] sm:$0xff]
  %v1168 = vld [vmem:[%s9 + $0x18] sm:$0xff]
  %v1169 = vld [vmem:[%s9 + $0x20] sm:$0xff]
  %v1170 = vld [vmem:[%s9 + $0x28] sm:$0xff]
  %v1171 = vld [vmem:[%s9 + $0x30] sm:$0xff]
  %v1172 = vld [vmem:[%s9 + $0x38] sm:$0xff]
  %v1173 = vld [vmem:[%s9 + $0x40] sm:$0xff]
  %v1174 = vld [vmem:[%s9 + $0x48] sm:$0xff]
  %v1175 = vld [vmem:[%s9 + $0x50] sm:$0xff]
  %v1176 = vld [vmem:[%s9 + $0x58] sm:$0xff]
  %v1177 = vld [vmem:[%s9 + $0x60] sm:$0xff]
  %v1178 = vld [vmem:[%s9 + $0x68] sm:$0xff]
  %v1179 = vld [vmem:[%s9 + $0x70] sm:$0xff]
  %v1180 = vld [vmem:[%s9 + $0x78] sm:$0xff]
  %1182 = vset.pattern.permute.xlu0 0
  %1183 = vperm.xlu0 %1182, %v1165
  %v1184 = vpop.permute.xlu0 %1183
  %1187 = vset.pattern.permute.xlu0 0
  %1188 = vperm.xlu0 %1187, %v1166
  %v1189 = vpop.permute.xlu0 %1188
  %1192 = vset.pattern.permute.xlu0 0
  %1193 = vperm.xlu0 %1192, %v1167
  %v1194 = vpop.permute.xlu0 %1193
  %1197 = vset.pattern.permute.xlu0 0
  %1198 = vperm.xlu0 %1197, %v1168
  %v1199 = vpop.permute.xlu0 %1198
  %1202 = vset.pattern.permute.xlu0 0
  %1203 = vperm.xlu0 %1202, %v1169
  %v1204 = vpop.permute.xlu0 %1203
  %1207 = vset.pattern.permute.xlu0 0
  %1208 = vperm.xlu0 %1207, %v1170
  %v1209 = vpop.permute.xlu0 %1208
  %1212 = vset.pattern.permute.xlu0 0
  %1213 = vperm.xlu0 %1212, %v1171
  %v1214 = vpop.permute.xlu0 %1213
  %1217 = vset.pattern.permute.xlu0 0
  %1218 = vperm.xlu0 %1217, %v1172
  %v1219 = vpop.permute.xlu0 %1218
  %1222 = vset.pattern.permute.xlu0 0
  %1223 = vperm.xlu0 %1222, %v1173
  %v1224 = vpop.permute.xlu0 %1223
  %1227 = vset.pattern.permute.xlu0 0
  %1228 = vperm.xlu0 %1227, %v1174
  %v1229 = vpop.permute.xlu0 %1228
  %1232 = vset.pattern.permute.xlu0 0
  %1233 = vperm.xlu0 %1232, %v1175
  %v1234 = vpop.permute.xlu0 %1233
  %1237 = vset.pattern.permute.xlu0 0
  %1238 = vperm.xlu0 %1237, %v1176
  %v1239 = vpop.permute.xlu0 %1238
  %1242 = vset.pattern.permute.xlu0 0
  %1243 = vperm.xlu0 %1242, %v1177
  %v1244 = vpop.permute.xlu0 %1243
  %1247 = vset.pattern.permute.xlu0 0
  %1248 = vperm.xlu0 %1247, %v1178
  %v1249 = vpop.permute.xlu0 %1248
  %1252 = vset.pattern.permute.xlu0 0
  %1253 = vperm.xlu0 %1252, %v1179
  %v1254 = vpop.permute.xlu0 %1253
  %1257 = vset.pattern.permute.xlu0 0
  %1258 = vperm.xlu0 %1257, %v1180
  %v1259 = vpop.permute.xlu0 %1258
  %v1261 = vmul.f32 %v1149, %v1184
  %v1262 = vmul.f32 %v1150, %v1189
  %v1263 = vmul.f32 %v1151, %v1194
  %v1264 = vmul.f32 %v1152, %v1199
  %v1265 = vmul.f32 %v1153, %v1204
  %v1266 = vmul.f32 %v1154, %v1209
  %v1267 = vmul.f32 %v1155, %v1214
  %v1268 = vmul.f32 %v1156, %v1219
  %v1269 = vmul.f32 %v1157, %v1224
  %v1270 = vmul.f32 %v1158, %v1229
  %v1271 = vmul.f32 %v1159, %v1234
  %v1272 = vmul.f32 %v1160, %v1239
  %v1273 = vmul.f32 %v1161, %v1244
  %v1274 = vmul.f32 %v1162, %v1249
  %v1275 = vmul.f32 %v1163, %v1254
  %v1276 = vmul.f32 %v1164, %v1259
  %v1277 = vadd.f32 %v1261, %v1262
  %v1278 = vadd.f32 %v1277, %v1263
  %v1279 = vadd.f32 %v1278, %v1264
  %v1280 = vadd.f32 %v1279, %v1265
  %v1281 = vadd.f32 %v1280, %v1266
  %v1282 = vadd.f32 %v1281, %v1267
  %v1283 = vadd.f32 %v1282, %v1268
  %v1284 = vadd.f32 %v1283, %v1269
  %v1285 = vadd.f32 %v1284, %v1270
  %v1286 = vadd.f32 %v1285, %v1271
  %v1287 = vadd.f32 %v1286, %v1272
  %v1288 = vadd.f32 %v1287, %v1273
  %v1289 = vadd.f32 %v1288, %v1274
  %v1290 = vadd.f32 %v1289, %v1275
  %v1291 = vadd.f32 %v1290, %v1276
  %v1292 = vrot.slane %v1291, 4
  %v1293 = vadd.f32 %v1291, %v1292
  %v1294 = vrot.slane %v1293, 2
  %v1295 = vadd.f32 %v1293, %v1294
  %v1296 = vrot.slane %v1295, 1
  %v1297 = vadd.f32 %v1295, %v1296
  %v1298 = vld [vmem:[#allocation2] sm:$0x1]
  %1300 = vset.pattern.permute.xlu0 0
  %1301 = vperm.xlu0 %1300, %v1298
  %v1302 = vpop.permute.xlu0 %1301
  %v1304 = vlaneseq
  %v1305 = vshrl.u32 %v1304, 7
  %v1306 = vsub.s32 0, %v1305
  %v1307 = vrot.slane %v1302, %v1306
  %v1308 = vadd.f32 %v1297, %v1307
  %1309 = vst [vmem:[%s11] sm:$0x1] %v1308
  // Predicated region
  $region46: #{_revenue_model_forward.1} parent=0 // pred_check
    _
  $region47: #{_revenue_model_forward.1} parent=0 // pred_check_branch
    %1311 = sbr.rel (0) target = $region49
  $region48: #{_revenue_model_forward.1} parent=0 // pred_region
    _
  $region49: #{_revenue_model_forward.1} parent=0 // pred_fallthru
    _
  // Predicated region
  $region50: #{_revenue_model_forward.1} parent=0 // pred_check
    _
  $region51: #{_revenue_model_forward.1} parent=0 // pred_check_branch
    %1313 = sbr.rel (0) target = $region53
  $region52: #{_revenue_model_forward.1} parent=0 // pred_region
    _
  $region53: #{_revenue_model_forward.1} parent=0 // pred_fallthru
    _

</llo_original>
